<compile_context>
chip_gen: v7x
topology: tpu7x:2x2x1
jax: 0.10.0
libtpu: 0.0.40
codegen_flags: <defaults>
</compile_context>

<pallas_src>
import functools

import numpy as np
import jax
import jax.numpy as jnp
from jax.experimental import pallas as pl
from jax.experimental.pallas import tpu as pltpu

_LANE = 128


def _round_up(x: int, m: int) -> int:
    return ((x + m - 1) // m) * m


# ----------------------------------------------------------------------------
# Kernel: theta tile (TB, 4P) x W_bc (4P, backcast) -> backcast tile
#         theta tile (TB, 4P) x W_fc (4P, forecast) -> forecast tile
# Two lane-contiguous stores, no in-kernel lane slicing of theta or the result.
# ----------------------------------------------------------------------------
def _seasonality_kernel(theta_ref, w_bc_ref, w_fc_ref, bc_ref, fc_ref,
                        *, precision):
    theta = theta_ref[...]
    bc_ref[...] = jnp.dot(theta, w_bc_ref[...],
                          preferred_element_type=jnp.float32,
                          precision=precision).astype(bc_ref.dtype)
    fc_ref[...] = jnp.dot(theta, w_fc_ref[...],
                          preferred_element_type=jnp.float32,
                          precision=precision).astype(fc_ref.dtype)


# ----------------------------------------------------------------------------
# Parameter construction (mirrors _SeasonalityBasis.__init__ exactly).
# ----------------------------------------------------------------------------
def make_seasonality_templates(harmonics: int, backcast_size: int,
                               forecast_size: int):
    frequency = np.append(
        np.zeros(1, dtype=np.float32),
        np.arange(harmonics, harmonics / 2 * forecast_size,
                  dtype=np.float32) / harmonics)[None, :]
    backcast_grid = (-2 * np.pi
                     * (np.arange(backcast_size, dtype=np.float32)[:, None]
                        / forecast_size) * frequency)
    forecast_grid = (2 * np.pi
                     * (np.arange(forecast_size, dtype=np.float32)[:, None]
                        / forecast_size) * frequency)
    backcast_cos = np.transpose(np.cos(backcast_grid)).astype(np.float32)  # (P, backcast)
    backcast_sin = np.transpose(np.sin(backcast_grid)).astype(np.float32)  # (P, backcast)
    forecast_cos = np.transpose(np.cos(forecast_grid)).astype(np.float32)  # (P, forecast)
    forecast_sin = np.transpose(np.sin(forecast_grid)).astype(np.float32)  # (P, forecast)
    return backcast_cos, backcast_sin, forecast_cos, forecast_sin


def make_split_seasonality_templates(harmonics: int, backcast_size: int,
                                     forecast_size: int,
                                     dtype=jnp.float32):
    """Block-structured templates so that, with theta in its original column
    order [fc_cos | fc_sin | bc_cos | bc_sin]:
        theta @ W_bc == backcast,   theta @ W_fc == forecast."""
    bc_cos, bc_sin, fc_cos, fc_sin = make_seasonality_templates(
        harmonics, backcast_size, forecast_size)
    p = bc_cos.shape[0]                                  # params_per_harmonic
    w_bc = np.zeros((4 * p, backcast_size), dtype=np.float32)
    w_bc[2 * p:3 * p, :] = bc_cos                        # theta[:, 2p:3p]
    w_bc[3 * p:4 * p, :] = bc_sin                        # theta[:, 3p:4p]
    w_fc = np.zeros((4 * p, forecast_size), dtype=np.float32)
    w_fc[0 * p:1 * p, :] = fc_cos                        # theta[:, 0:p]
    w_fc[1 * p:2 * p, :] = fc_sin                        # theta[:, p:2p]
    return jnp.asarray(w_bc, dtype=dtype), jnp.asarray(w_fc, dtype=dtype)


# ----------------------------------------------------------------------------
# Pallas wrapper: batch-tiled, two fused matmuls, two direct kernel outputs.
# ----------------------------------------------------------------------------
def seasonality_basis_forward(theta, w_bc, w_fc, *,
                              block_b: int = 4096,
                              min_pallas_batch: int = 1024,
                              vmem_budget_bytes: int = 24 << 20):
    """theta (B, 4P) -> (backcast (B, backcast_size), forecast (B, forecast_size)).

    theta / templates may be f32 (bit-accurate, Precision.HIGHEST) or bf16
    (opt-in, halves HBM traffic; f32 accumulation on the MXU).
    """
    B, K = theta.shape
    Kb, t_bc = w_bc.shape
    Kf, t_fc = w_fc.shape
    assert K == Kb == Kf, "theta_size must be 4 * params_per_harmonic"

    out_dtype = theta.dtype
    precision = (jax.lax.Precision.HIGHEST if theta.dtype == jnp.float32
                 else jax.lax.Precision.DEFAULT)

    # ---- Small-batch fallback: launch/grid overhead dwarfs ~KBs of work. ----
    if B < min_pallas_batch:
        bc = jnp.dot(theta, w_bc, preferred_element_type=jnp.float32,
                     precision=precision).astype(out_dtype)
        fc = jnp.dot(theta, w_fc, preferred_element_type=jnp.float32,
                     precision=precision).astype(out_dtype)
        return bc, fc

    # ---- Batch-tile selection against the lane-padded VMEM footprint. ----
    in_bytes = jnp.dtype(theta.dtype).itemsize
    out_bytes = jnp.dtype(out_dtype).itemsize
    w_bytes = jnp.dtype(w_bc.dtype).itemsize
    # Last dims are padded to 128 lanes in VMEM.
    per_row = (_round_up(K, _LANE) * in_bytes
               + _round_up(t_bc, _LANE) * out_bytes
               + _round_up(t_fc, _LANE) * out_bytes)
    max_tb_by_vmem = max(8, (vmem_budget_bytes // (2 * per_row)) // 8 * 8)

    tb = min(block_b, B, max_tb_by_vmem)
    if tb < B:
        tb = max(8, (tb // 8) * 8)          # aligned tile, multiple grid steps
    elif B >= 4096:
        # Whole batch fits in one step but is large: split into >=2 steps so
        # the "parallel" axis can be sharded across both v7x TensorCores.
        tb = max(8, _round_up(pl.cdiv(B, 2), 8))
    grid = (pl.cdiv(B, tb),)

    # Explicit VMEM limit: double-buffered tiles + resident templates + slack.
    w_resident = (_round_up(K, 8)
                  * (_round_up(t_bc, _LANE) + _round_up(t_fc, _LANE)) * w_bytes)
    needed = 2 * tb * per_row + 2 * w_resident + (2 << 20)
    vmem_limit = int(min(max(needed, 16 << 20), 48 << 20))

    kernel = functools.partial(_seasonality_kernel, precision=precision)

    bc, fc = pl.pallas_call(
        kernel,
        out_shape=(jax.ShapeDtypeStruct((B, t_bc), out_dtype),
                   jax.ShapeDtypeStruct((B, t_fc), out_dtype)),
        grid=grid,
        in_specs=[
            # theta: tiled over batch, double-buffered by the BlockSpec pipeline.
            pl.BlockSpec((tb, K), lambda i: (i, 0)),
            # templates: tiny, stay VMEM-resident across all grid steps.
            pl.BlockSpec((K, t_bc), lambda i: (0, 0)),
            pl.BlockSpec((K, t_fc), lambda i: (0, 0)),
        ],
        out_specs=[
            pl.BlockSpec((tb, t_bc), lambda i: (i, 0)),
            pl.BlockSpec((tb, t_fc), lambda i: (i, 0)),
        ],
        compiler_params=pltpu.CompilerParams(
            dimension_semantics=("parallel",),     # megacore-shardable batch axis
            vmem_limit_bytes=vmem_limit),
        cost_estimate=pl.CostEstimate(
            flops=2 * B * K * (t_bc + t_fc),
            transcendentals=0,
            bytes_accessed=(B * K * in_bytes
                            + K * (t_bc + t_fc) * w_bytes
                            + B * (t_bc + t_fc) * out_bytes)),
    )(theta, w_bc, w_fc)
    return bc, fc


# ----------------------------------------------------------------------------
# Pure-JAX reference: byte-for-byte the PyTorch forward semantics.
# ----------------------------------------------------------------------------
def seasonality_basis_reference(theta, bc_cos, bc_sin, fc_cos, fc_sin):
    p = theta.shape[1] // 4
    backcast = (jnp.einsum('bp,pt->bt', theta[:, 3 * p:], bc_sin,
                           precision=jax.lax.Precision.HIGHEST)
                + jnp.einsum('bp,pt->bt', theta[:, 2 * p:3 * p], bc_cos,
                             precision=jax.lax.Precision.HIGHEST))
    forecast = (jnp.einsum('bp,pt->bt', theta[:, p:2 * p], fc_sin,
                           precision=jax.lax.Precision.HIGHEST)
                + jnp.einsum('bp,pt->bt', theta[:, :p], fc_cos,
                             precision=jax.lax.Precision.HIGHEST))
    return backcast, forecast


if __name__ == "__main__":
    # Small, deterministic configuration.
    harmonics = 2
    backcast_size = 16
    forecast_size = 8

    bc_cos, bc_sin, fc_cos, fc_sin = make_seasonality_templates(
        harmonics, backcast_size, forecast_size)
    bc_cos_j, bc_sin_j = jnp.asarray(bc_cos), jnp.asarray(bc_sin)
    fc_cos_j, fc_sin_j = jnp.asarray(fc_cos), jnp.asarray(fc_sin)
    w_bc, w_fc = make_split_seasonality_templates(
        harmonics, backcast_size, forecast_size)

    P = bc_cos.shape[0]                 # params_per_harmonic (=7 here)
    theta_size = 4 * P
    key = jax.random.PRNGKey(0)

    # Case 1: tiny batch, single grid step, force the Pallas path.
    batch = 8
    theta = jax.random.normal(key, (batch, theta_size), dtype=jnp.float32)
    backcast, forecast = seasonality_basis_forward(
        theta, w_bc, w_fc, min_pallas_batch=0)
    jax.block_until_ready((backcast, forecast))
    ref_bc, ref_fc = seasonality_basis_reference(
        theta, bc_cos_j, bc_sin_j, fc_cos_j, fc_sin_j)
    np.testing.assert_allclose(np.asarray(backcast), np.asarray(ref_bc),
                               rtol=1e-5, atol=1e-5)
    np.testing.assert_allclose(np.asarray(forecast), np.asarray(ref_fc),
                               rtol=1e-5, atol=1e-5)
    assert backcast.shape == (batch, backcast_size)
    assert forecast.shape == (batch, forecast_size)

    # Case 2: larger batch, small block_b -> multiple grid steps (exercises
    # the batch-tiled, double-buffered pipeline path).
    batch2 = 64
    theta2 = jax.random.normal(jax.random.PRNGKey(1), (batch2, theta_size),
                               dtype=jnp.float32)
    backcast2, forecast2 = seasonality_basis_forward(
        theta2, w_bc, w_fc, block_b=16, min_pallas_batch=0)
    jax.block_until_ready((backcast2, forecast2))
    ref_bc2, ref_fc2 = seasonality_basis_reference(
        theta2, bc_cos_j, bc_sin_j, fc_cos_j, fc_sin_j)
    np.testing.assert_allclose(np.asarray(backcast2), np.asarray(ref_bc2),
                               rtol=1e-5, atol=1e-5)
    np.testing.assert_allclose(np.asarray(forecast2), np.asarray(ref_fc2),
                               rtol=1e-5, atol=1e-5)

    # Case 3: small-batch XLA fallback path (default min_pallas_batch).
    backcast3, forecast3 = seasonality_basis_forward(theta2, w_bc, w_fc)
    jax.block_until_ready((backcast3, forecast3))
    np.testing.assert_allclose(np.asarray(backcast3), np.asarray(ref_bc2),
                               rtol=1e-5, atol=1e-5)
    np.testing.assert_allclose(np.asarray(forecast3), np.asarray(ref_fc2),
                               rtol=1e-5, atol=1e-5)

    # Case 4: opt-in bf16 operand path (f32 accumulation) — smoke check with a
    # loose tolerance; this halves HBM traffic on the memory-bound kernel.
    theta_bf = theta.astype(jnp.bfloat16)
    w_bc_bf, w_fc_bf = make_split_seasonality_templates(
        harmonics, backcast_size, forecast_size, dtype=jnp.bfloat16)
    bc_bf, fc_bf = seasonality_basis_forward(
        theta_bf, w_bc_bf, w_fc_bf, min_pallas_batch=0)
    jax.block_until_ready((bc_bf, fc_bf))
    np.testing.assert_allclose(np.asarray(bc_bf.astype(jnp.float32)),
                               np.asarray(ref_bc), rtol=5e-2, atol=2e-1)
    np.testing.assert_allclose(np.asarray(fc_bf.astype(jnp.float32)),
                               np.asarray(ref_fc), rtol=5e-2, atol=2e-1)

    print("KERNEL_OK")
</pallas_src>

<mosaic_0001>
module attributes {stable_mosaic.version = 11 : i64} {
  func.func @_seasonality_kernel(%arg0: i32, %arg1: memref<8x28xf32, #tpu.memory_space<vmem>>, %arg2: memref<28x16xf32, #tpu.memory_space<vmem>>, %arg3: memref<28x8xf32, #tpu.memory_space<vmem>>, %arg4: memref<8x16xf32, #tpu.memory_space<vmem>>, %arg5: memref<8x8xf32, #tpu.memory_space<vmem>>) attributes {dimension_semantics = [#tpu.dimension_semantics<parallel>], iteration_bounds = array<i64: 1>, scalar_prefetch = 0 : i64, scratch_operands = 0 : i64, tpu.core_type = #tpu.core_type<tc>, window_params = [{transform_indices = @transform_0, window_bounds = array<i64: 8, 28>}, {pipeline_mode = #tpu.pipeline_mode<synchronous>, transform_indices = @transform_1, window_bounds = array<i64: 28, 16>}, {pipeline_mode = #tpu.pipeline_mode<synchronous>, transform_indices = @transform_2, window_bounds = array<i64: 28, 8>}, {transform_indices = @transform_3, window_bounds = array<i64: 8, 16>}, {transform_indices = @transform_4, window_bounds = array<i64: 8, 8>}]} {
    %c0 = arith.constant 0 : index
    %c0_0 = arith.constant 0 : index
    %0 = vector.load %arg1[%c0, %c0_0] : memref<8x28xf32, #tpu.memory_space<vmem>>, vector<8x28xf32>
    %c0_1 = arith.constant 0 : index
    %c0_2 = arith.constant 0 : index
    %1 = vector.load %arg2[%c0_1, %c0_2] : memref<28x16xf32, #tpu.memory_space<vmem>>, vector<28x16xf32>
    %cst = arith.constant dense<0.000000e+00> : vector<8x16xf32>
    %2 = tpu.matmul %0, %1, %cst {dimension_numbers = #tpu.dot_dimension_numbers<[1], [0], [0], [1], [0, 0, 1, 1], [], []>, precision = #tpu.contract_precision<fp32>} : vector<8x28xf32>, vector<28x16xf32>, vector<8x16xf32> -> vector<8x16xf32>
    %c0_3 = arith.constant 0 : index
    %c0_4 = arith.constant 0 : index
    %3 = vector.load %arg4[%c0_3, %c0_4] : memref<8x16xf32, #tpu.memory_space<vmem>>, vector<8x16xf32>
    tpu.vector_store %arg4[%c0_3, %c0_4], %2 {strides = array<i32>} : memref<8x16xf32, #tpu.memory_space<vmem>>, vector<8x16xf32>,
    %c0_5 = arith.constant 0 : index
    %c0_6 = arith.constant 0 : index
    %4 = vector.load %arg3[%c0_5, %c0_6] : memref<28x8xf32, #tpu.memory_space<vmem>>, vector<28x8xf32>
    %cst_7 = arith.constant dense<0.000000e+00> : vector<8x8xf32>
    %5 = tpu.matmul %0, %4, %cst_7 {dimension_numbers = #tpu.dot_dimension_numbers<[1], [0], [0], [1], [0, 0, 1, 1], [], []>, precision = #tpu.contract_precision<fp32>} : vector<8x28xf32>, vector<28x8xf32>, vector<8x8xf32> -> vector<8x8xf32>
    %c0_8 = arith.constant 0 : index
    %c0_9 = arith.constant 0 : index
    %6 = vector.load %arg5[%c0_8, %c0_9] : memref<8x8xf32, #tpu.memory_space<vmem>>, vector<8x8xf32>
    tpu.vector_store %arg5[%c0_8, %c0_9], %5 {strides = array<i32>} : memref<8x8xf32, #tpu.memory_space<vmem>>, vector<8x8xf32>,
    return
  }
  func.func @transform_0(%arg0: i32) -> (i32, i32) {
    %c0_i32 = arith.constant 0 : i32
    %c0_i32_0 = arith.constant 0 : i32
    return %arg0, %c0_i32 : i32, i32
  }
  func.func @transform_1(%arg0: i32) -> (i32, i32) {
    %c0_i32 = arith.constant 0 : i32
    %c0_i32_0 = arith.constant 0 : i32
    %c0_i32_1 = arith.constant 0 : i32
    return %c0_i32, %c0_i32_0 : i32, i32
  }
  func.func @transform_2(%arg0: i32) -> (i32, i32) {
    %c0_i32 = arith.constant 0 : i32
    %c0_i32_0 = arith.constant 0 : i32
    %c0_i32_1 = arith.constant 0 : i32
    return %c0_i32, %c0_i32_0 : i32, i32
  }
  func.func @transform_3(%arg0: i32) -> (i32, i32) {
    %c0_i32 = arith.constant 0 : i32
    %c0_i32_0 = arith.constant 0 : i32
    return %arg0, %c0_i32 : i32, i32
  }
  func.func @transform_4(%arg0: i32) -> (i32, i32) {
    %c0_i32 = arith.constant 0 : i32
    %c0_i32_0 = arith.constant 0 : i32
    return %arg0, %c0_i32 : i32, i32
  }
}

</mosaic_0001>

<llo_original>
// kernel: tpu_custom_call.1
$region0: #{tpu_custom_call.1}
  #allocation0 [shape = 'u32[]', space=smem, size = 0x4, offset = 0x4, fixed_abs, tag = 'smem constant byte address 0x4 - core index']
  #allocation1 [shape = 'u32[144,128]{1,0:T(1,128)}', space=vmem, size = 0x12000, scoped, tag = 'internal scratch']
  %s0 = inlined_call_operand.vmem [shape: f32[8,28], index: 0, kind: input, shape index: {}]
  %s1 = inlined_call_operand.vmem [shape: f32[28,16], index: 1, kind: input, shape index: {}]
  %s2 = inlined_call_operand.vmem [shape: f32[28,8], index: 2, kind: input, shape index: {}]
  %s3 = inlined_call_operand.hbm [shape: f32[8,16], index: 3, kind: output, shape index: {0}]
  %s4 = inlined_call_operand.hbm [shape: f32[8,8], index: 4, kind: output, shape index: {1}]
  %5 = xla_tuple %s3, %s4
  %s6 = sld [smem:[#allocation0]]
  $region30: #{tpu_custom_call.1} parent=0
    _
  %s8 = ssub.s32 1, %s6
  %s9 = scalar_select 0, %s8, %s6
  $region1: #{tpu_custom_call.1} parent=0
    #allocation2 [shape = 'u8[4096]{0}', space=vmem, size = 0x1000, scoped, tag = 'output window, operand 0, single buffered']
    #allocation3 [shape = 's32[1]{0}', space=sflag, size = 0x4, scoped, tag = 'scoped memory for tpu_custom_call.1']
    #allocation4 [shape = 'u8[4096]{0}', space=vmem, size = 0x1000, scoped, tag = 'output window, operand 1, single buffered']
    #allocation5 [shape = 's32[1]{0}', space=sflag, size = 0x4, scoped, tag = 'scoped memory for tpu_custom_call.1']
    %10 = vsyncpa [#allocation3], 0
    %11 = vsyncpa [#allocation5], 0
    // Predicated region
    $region2: #{tpu_custom_call.1} parent=1 // pred_check
      _
    $region3: #{tpu_custom_call.1} parent=1 // pred_check_branch
      %13 = sbr.rel (0) target = $region5
    $region4: #{tpu_custom_call.1} parent=1 // pred_region
      _
    $region5: #{tpu_custom_call.1} parent=1 // pred_fallthru
      _
    // Predicated region
    $region6: #{tpu_custom_call.1} parent=1 // pred_check
      _
    $region7: #{tpu_custom_call.1} parent=1 // pred_check_branch
      %15 = sbr.rel (0) target = $region9
    $region8: #{tpu_custom_call.1} parent=1 // pred_region
      _
    $region9: #{tpu_custom_call.1} parent=1 // pred_fallthru
      _
    // Predicated region
    $region10: #{tpu_custom_call.1} parent=1 // pred_check
      _
    $region11: #{tpu_custom_call.1} parent=1 // pred_check_branch
      %17 = sbr.rel (0) target = $region13
    $region12: #{tpu_custom_call.1} parent=1 // pred_region
      _
    $region13: #{tpu_custom_call.1} parent=1 // pred_fallthru
      _
    %v18 = vld [vmem:[%s0] sm:$0xff]
    %v19 = vld [vmem:[%s1] sm:$0xff]
    %v20 = vld [vmem:[%s1 + $0x8] sm:$0xff]
    %v21 = vld [vmem:[%s1 + $0x10] sm:$0xff]
    %v22 = vld [vmem:[%s1 + $0x18] sm:$0xf]
    %vm23 = vcmask 228352
    %v25 = vsel %vm23, %v18, 0
    %vm27 = vcmask 1043456
    %v29 = vsel %vm27, %v22, 0
    %31 = vmatprep.subr.mxu0 0.0
    %v32 = vand.u32 %v19, 4294901760
    %33 = vmatpush1.msra.mxu0 %v32
    %34 = vmatprep.subr.mxu0 0.0
    %v35 = vand.u32 %v20, 4294901760
    %36 = vmatpush1.msra.mxu0 %v35
    %37 = vmatprep.subr.mxu0 0.0
    %v38 = vand.u32 %v21, 4294901760
    %39 = vmatpush1.msra.mxu0 %v38
    %40 = vmatprep.subr.mxu0 0.0
    %v41 = vand.u32 %v29, 4294901760
    %42 = vmatpush1.msra.mxu0 %v41
    %43 = vmatprep.subr.mxu0 0.0
    %44 = vmatpush1.msra.mxu0 0.0
    %45 = vmatprep.subr.mxu0 0.0
    %46 = vmatpush1.msra.mxu0 0.0
    %47 = vmatprep.subr.mxu0 0.0
    %48 = vmatpush1.msra.mxu0 0.0
    %49 = vmatprep.subr.mxu0 0.0
    %50 = vmatpush1.msra.mxu0 0.0
    %51 = vmatprep.subr.mxu0 0.0
    %52 = vmatpush1.msra.mxu0 0.0
    %53 = vmatprep.subr.mxu0 0.0
    %54 = vmatpush1.msra.mxu0 0.0
    %55 = vmatprep.subr.mxu0 0.0
    %56 = vmatpush1.msra.mxu0 0.0
    %57 = vmatprep.subr.mxu0 0.0
    %58 = vmatpush1.msra.mxu0 0.0
    %59 = vmatprep.subr.mxu0 0.0
    %60 = vmatpush1.msra.mxu0 0.0
    %61 = vmatprep.subr.mxu0 0.0
    %62 = vmatpush1.msra.mxu0 0.0
    %63 = vmatprep.subr.mxu0 0.0
    %64 = vmatpush1.msra.mxu0 0.0
    %65 = vmatprep.subr.mxu0 0.0
    %66 = vmatpush1.msra.mxu0 0.0
    %67 = vmatprep.subr.mxu0 0.0
    %68 = vmatpush1.msra.mxu0 0.0
    %69 = vmatprep.subr.mxu0 0.0
    %70 = vmatpush1.msra.mxu0 0.0
    %71 = vmatprep.subr.mxu0 0.0
    %72 = vmatpush1.msra.mxu0 0.0
    %73 = vmatprep.subr.mxu0 0.0
    %74 = vmatpush1.msra.mxu0 0.0
    %75 = vmatprep.subr.mxu0 0.0
    %76 = vmatpush1.msra.mxu0 0.0
    %77 = vmatprep.subr.mxu0 0.0
    %78 = vmatpush1.msra.mxu0 0.0
    %79 = vmatprep.subr.mxu0 0.0
    %80 = vmatpush1.msra.mxu0 0.0
    %81 = vmatprep.subr.mxu0 0.0
    %82 = vmatpush1.msra.mxu0 0.0
    %83 = vmatprep.subr.mxu0 0.0
    %84 = vmatpush1.msra.mxu0 0.0
    %85 = vmatprep.subr.mxu0 0.0
    %86 = vmatpush1.msra.mxu0 0.0
    %87 = vmatprep.subr.mxu0 0.0
    %88 = vmatpush1.msra.mxu0 0.0
    %89 = vmatprep.subr.mxu0 0.0
    %90 = vmatpush1.msra.mxu0 0.0
    %91 = vmatprep.subr.mxu0 0.0
    %92 = vmatpush1.msra.mxu0 0.0
    %93 = vmatprep.subr.mxu0 0.0
    %94 = vmatpush1.msra.mxu0 0.0
    %95 = vmatprep.subr.mxu0 0.0
    %96 = vmatpush1.msra.mxu0 0.0
    %97 = vmatprep.subr.mxu0 0.0
    %98 = vmatpush1.msra.mxu0 0.0
    %99 = vmatprep.mubr.f32.mxu0 0.0
    %v100 = vand.u32 %v25, 4294901760
    %v101 = vsub.f32 %v25, %v100
    %v102 = vand.u32 %v101, 4294901760
    %v103 = vsub.f32 %v101, %v102
    %v104 = vand.u32 %v103, 4294901760
    %105 = vmatmul.mubr.f32.gmra.mrb[0].mxu0 %v104
    %v106 = vpop.f32.mrb[0].mxu0
    %v107 = vadd.f32 0.0, %v106
    %v108 = vpop.f32.mrb[0].mxu0
    %109 = vdwg.mxu0
    %110 = vmatprep.subr.mxu0 0.0
    %v111 = vand.u32 %v19, 4294901760
    %v112 = vsub.f32 %v19, %v111
    %v113 = vand.u32 %v112, 4294901760
    %v114 = vsub.f32 %v112, %v113
    %v115 = vand.u32 %v114, 4294901760
    %116 = vmatpush1.msra.mxu0 %v115
    %117 = vmatprep.subr.mxu0 0.0
    %v118 = vand.u32 %v20, 4294901760
    %v119 = vsub.f32 %v20, %v118
    %v120 = vand.u32 %v119, 4294901760
    %v121 = vsub.f32 %v119, %v120
    %v122 = vand.u32 %v121, 4294901760
    %123 = vmatpush1.msra.mxu0 %v122
    %124 = vmatprep.subr.mxu0 0.0
    %v125 = vand.u32 %v21, 4294901760
    %v126 = vsub.f32 %v21, %v125
    %v127 = vand.u32 %v126, 4294901760
    %v128 = vsub.f32 %v126, %v127
    %v129 = vand.u32 %v128, 4294901760
    %130 = vmatpush1.msra.mxu0 %v129
    %131 = vmatprep.subr.mxu0 0.0
    %v132 = vand.u32 %v29, 4294901760
    %v133 = vsub.f32 %v29, %v132
    %v134 = vand.u32 %v133, 4294901760
    %v135 = vsub.f32 %v133, %v134
    %v136 = vand.u32 %v135, 4294901760
    %137 = vmatpush1.msra.mxu0 %v136
    %138 = vmatprep.subr.mxu0 0.0
    %139 = vmatpush1.msra.mxu0 0.0
    %140 = vmatprep.subr.mxu0 0.0
    %141 = vmatpush1.msra.mxu0 0.0
    %142 = vmatprep.subr.mxu0 0.0
    %143 = vmatpush1.msra.mxu0 0.0
    %144 = vmatprep.subr.mxu0 0.0
    %145 = vmatpush1.msra.mxu0 0.0
    %146 = vmatprep.subr.mxu0 0.0
    %147 = vmatpush1.msra.mxu0 0.0
    %148 = vmatprep.subr.mxu0 0.0
    %149 = vmatpush1.msra.mxu0 0.0
    %150 = vmatprep.subr.mxu0 0.0
    %151 = vmatpush1.msra.mxu0 0.0
    %152 = vmatprep.subr.mxu0 0.0
    %153 = vmatpush1.msra.mxu0 0.0
    %154 = vmatprep.subr.mxu0 0.0
    %155 = vmatpush1.msra.mxu0 0.0
    %156 = vmatprep.subr.mxu0 0.0
    %157 = vmatpush1.msra.mxu0 0.0
    %158 = vmatprep.subr.mxu0 0.0
    %159 = vmatpush1.msra.mxu0 0.0
    %160 = vmatprep.subr.mxu0 0.0
    %161 = vmatpush1.msra.mxu0 0.0
    %162 = vmatprep.subr.mxu0 0.0
    %163 = vmatpush1.msra.mxu0 0.0
    %164 = vmatprep.subr.mxu0 0.0
    %165 = vmatpush1.msra.mxu0 0.0
    %166 = vmatprep.subr.mxu0 0.0
    %167 = vmatpush1.msra.mxu0 0.0
    %168 = vmatprep.subr.mxu0 0.0
    %169 = vmatpush1.msra.mxu0 0.0
    %170 = vmatprep.subr.mxu0 0.0
    %171 = vmatpush1.msra.mxu0 0.0
    %172 = vmatprep.subr.mxu0 0.0
    %173 = vmatpush1.msra.mxu0 0.0
    %174 = vmatprep.subr.mxu0 0.0
    %175 = vmatpush1.msra.mxu0 0.0
    %176 = vmatprep.subr.mxu0 0.0
    %177 = vmatpush1.msra.mxu0 0.0
    %178 = vmatprep.subr.mxu0 0.0
    %179 = vmatpush1.msra.mxu0 0.0
    %180 = vmatprep.subr.mxu0 0.0
    %181 = vmatpush1.msra.mxu0 0.0
    %182 = vmatprep.subr.mxu0 0.0
    %183 = vmatpush1.msra.mxu0 0.0
    %184 = vmatprep.subr.mxu0 0.0
    %185 = vmatpush1.msra.mxu0 0.0
    %186 = vmatprep.subr.mxu0 0.0
    %187 = vmatpush1.msra.mxu0 0.0
    %188 = vmatprep.subr.mxu0 0.0
    %189 = vmatpush1.msra.mxu0 0.0
    %190 = vmatprep.subr.mxu0 0.0
    %191 = vmatpush1.msra.mxu0 0.0
    %192 = vmatprep.subr.mxu0 0.0
    %193 = vmatpush1.msra.mxu0 0.0
    %194 = vmatprep.mubr.f32.mxu0 0.0
    %v195 = vand.u32 %v25, 4294901760
    %196 = vmatmul.mubr.f32.gmra.mrb[0].mxu0 %v195
    %v197 = vpop.f32.mrb[0].mxu0
    %v198 = vadd.f32 %v107, %v197
    %v199 = vpop.f32.mrb[0].mxu0
    %200 = vdwg.mxu0
    %201 = vmatprep.subr.mxu0 0.0
    %v202 = vand.u32 %v19, 4294901760
    %v203 = vsub.f32 %v19, %v202
    %204 = vmatpush1.msra.mxu0 %v203
    %205 = vmatprep.subr.mxu0 0.0
    %v206 = vand.u32 %v20, 4294901760
    %v207 = vsub.f32 %v20, %v206
    %208 = vmatpush1.msra.mxu0 %v207
    %209 = vmatprep.subr.mxu0 0.0
    %v210 = vand.u32 %v21, 4294901760
    %v211 = vsub.f32 %v21, %v210
    %212 = vmatpush1.msra.mxu0 %v211
    %213 = vmatprep.subr.mxu0 0.0
    %v214 = vand.u32 %v29, 4294901760
    %v215 = vsub.f32 %v29, %v214
    %216 = vmatpush1.msra.mxu0 %v215
    %217 = vmatprep.subr.mxu0 0.0
    %218 = vmatpush1.msra.mxu0 0.0
    %219 = vmatprep.subr.mxu0 0.0
    %220 = vmatpush1.msra.mxu0 0.0
    %221 = vmatprep.subr.mxu0 0.0
    %222 = vmatpush1.msra.mxu0 0.0
    %223 = vmatprep.subr.mxu0 0.0
    %224 = vmatpush1.msra.mxu0 0.0
    %225 = vmatprep.subr.mxu0 0.0
    %226 = vmatpush1.msra.mxu0 0.0
    %227 = vmatprep.subr.mxu0 0.0
    %228 = vmatpush1.msra.mxu0 0.0
    %229 = vmatprep.subr.mxu0 0.0
    %230 = vmatpush1.msra.mxu0 0.0
    %231 = vmatprep.subr.mxu0 0.0
    %232 = vmatpush1.msra.mxu0 0.0
    %233 = vmatprep.subr.mxu0 0.0
    %234 = vmatpush1.msra.mxu0 0.0
    %235 = vmatprep.subr.mxu0 0.0
    %236 = vmatpush1.msra.mxu0 0.0
    %237 = vmatprep.subr.mxu0 0.0
    %238 = vmatpush1.msra.mxu0 0.0
    %239 = vmatprep.subr.mxu0 0.0
    %240 = vmatpush1.msra.mxu0 0.0
    %241 = vmatprep.subr.mxu0 0.0
    %242 = vmatpush1.msra.mxu0 0.0
    %243 = vmatprep.subr.mxu0 0.0
    %244 = vmatpush1.msra.mxu0 0.0
    %245 = vmatprep.subr.mxu0 0.0
    %246 = vmatpush1.msra.mxu0 0.0
    %247 = vmatprep.subr.mxu0 0.0
    %248 = vmatpush1.msra.mxu0 0.0
    %249 = vmatprep.subr.mxu0 0.0
    %250 = vmatpush1.msra.mxu0 0.0
    %251 = vmatprep.subr.mxu0 0.0
    %252 = vmatpush1.msra.mxu0 0.0
    %253 = vmatprep.subr.mxu0 0.0
    %254 = vmatpush1.msra.mxu0 0.0
    %255 = vmatprep.subr.mxu0 0.0
    %256 = vmatpush1.msra.mxu0 0.0
    %257 = vmatprep.subr.mxu0 0.0
    %258 = vmatpush1.msra.mxu0 0.0
    %259 = vmatprep.subr.mxu0 0.0
    %260 = vmatpush1.msra.mxu0 0.0
    %261 = vmatprep.subr.mxu0 0.0
    %262 = vmatpush1.msra.mxu0 0.0
    %263 = vmatprep.subr.mxu0 0.0
    %264 = vmatpush1.msra.mxu0 0.0
    %265 = vmatprep.subr.mxu0 0.0
    %266 = vmatpush1.msra.mxu0 0.0
    %267 = vmatprep.subr.mxu0 0.0
    %268 = vmatpush1.msra.mxu0 0.0
    %269 = vmatprep.subr.mxu0 0.0
    %270 = vmatpush1.msra.mxu0 0.0
    %271 = vmatprep.subr.mxu0 0.0
    %272 = vmatpush1.msra.mxu0 0.0
    %273 = vmatprep.mubr.f32.mxu0 0.0
    %v274 = vand.u32 %v25, 4294901760
    %v275 = vsub.f32 %v25, %v274
    %276 = vmatmul.mubr.f32.gmra.mrb[0].mxu0 %v275
    %v277 = vpop.f32.mrb[0].mxu0
    %v278 = vadd.f32 %v198, %v277
    %v279 = vpop.f32.mrb[0].mxu0
    %280 = vdwg.mxu0
    %281 = vmatprep.subr.mxu0 0.0
    %v282 = vand.u32 %v19, 4294901760
    %283 = vmatpush1.msra.mxu0 %v282
    %284 = vmatprep.subr.mxu0 0.0
    %v285 = vand.u32 %v20, 4294901760
    %286 = vmatpush1.msra.mxu0 %v285
    %287 = vmatprep.subr.mxu0 0.0
    %v288 = vand.u32 %v21, 4294901760
    %289 = vmatpush1.msra.mxu0 %v288
    %290 = vmatprep.subr.mxu0 0.0
    %v291 = vand.u32 %v29, 4294901760
    %292 = vmatpush1.msra.mxu0 %v291
    %293 = vmatprep.subr.mxu0 0.0
    %294 = vmatpush1.msra.mxu0 0.0
    %295 = vmatprep.subr.mxu0 0.0
    %296 = vmatpush1.msra.mxu0 0.0
    %297 = vmatprep.subr.mxu0 0.0
    %298 = vmatpush1.msra.mxu0 0.0
    %299 = vmatprep.subr.mxu0 0.0
    %300 = vmatpush1.msra.mxu0 0.0
    %301 = vmatprep.subr.mxu0 0.0
    %302 = vmatpush1.msra.mxu0 0.0
    %303 = vmatprep.subr.mxu0 0.0
    %304 = vmatpush1.msra.mxu0 0.0
    %305 = vmatprep.subr.mxu0 0.0
    %306 = vmatpush1.msra.mxu0 0.0
    %307 = vmatprep.subr.mxu0 0.0
    %308 = vmatpush1.msra.mxu0 0.0
    %309 = vmatprep.subr.mxu0 0.0
    %310 = vmatpush1.msra.mxu0 0.0
    %311 = vmatprep.subr.mxu0 0.0
    %312 = vmatpush1.msra.mxu0 0.0
    %313 = vmatprep.subr.mxu0 0.0
    %314 = vmatpush1.msra.mxu0 0.0
    %315 = vmatprep.subr.mxu0 0.0
    %316 = vmatpush1.msra.mxu0 0.0
    %317 = vmatprep.subr.mxu0 0.0
    %318 = vmatpush1.msra.mxu0 0.0
    %319 = vmatprep.subr.mxu0 0.0
    %320 = vmatpush1.msra.mxu0 0.0
    %321 = vmatprep.subr.mxu0 0.0
    %322 = vmatpush1.msra.mxu0 0.0
    %323 = vmatprep.subr.mxu0 0.0
    %324 = vmatpush1.msra.mxu0 0.0
    %325 = vmatprep.subr.mxu0 0.0
    %326 = vmatpush1.msra.mxu0 0.0
    %327 = vmatprep.subr.mxu0 0.0
    %328 = vmatpush1.msra.mxu0 0.0
    %329 = vmatprep.subr.mxu0 0.0
    %330 = vmatpush1.msra.mxu0 0.0
    %331 = vmatprep.subr.mxu0 0.0
    %332 = vmatpush1.msra.mxu0 0.0
    %333 = vmatprep.subr.mxu0 0.0
    %334 = vmatpush1.msra.mxu0 0.0
    %335 = vmatprep.subr.mxu0 0.0
    %336 = vmatpush1.msra.mxu0 0.0
    %337 = vmatprep.subr.mxu0 0.0
    %338 = vmatpush1.msra.mxu0 0.0
    %339 = vmatprep.subr.mxu0 0.0
    %340 = vmatpush1.msra.mxu0 0.0
    %341 = vmatprep.subr.mxu0 0.0
    %342 = vmatpush1.msra.mxu0 0.0
    %343 = vmatprep.subr.mxu0 0.0
    %344 = vmatpush1.msra.mxu0 0.0
    %345 = vmatprep.subr.mxu0 0.0
    %346 = vmatpush1.msra.mxu0 0.0
    %347 = vmatprep.subr.mxu0 0.0
    %348 = vmatpush1.msra.mxu0 0.0
    %349 = vmatprep.mubr.f32.mxu0 0.0
    %v350 = vand.u32 %v25, 4294901760
    %v351 = vsub.f32 %v25, %v350
    %v352 = vand.u32 %v351, 4294901760
    %353 = vmatmul.mubr.f32.gmra.mrb[0].mxu0 %v352
    %v354 = vpop.f32.mrb[0].mxu0
    %v355 = vadd.f32 %v278, %v354
    %v356 = vpop.f32.mrb[0].mxu0
    %357 = vdwg.mxu0
    %358 = vmatprep.subr.mxu0 0.0
    %v359 = vand.u32 %v19, 4294901760
    %v360 = vsub.f32 %v19, %v359
    %v361 = vand.u32 %v360, 4294901760
    %362 = vmatpush1.msra.mxu0 %v361
    %363 = vmatprep.subr.mxu0 0.0
    %v364 = vand.u32 %v20, 4294901760
    %v365 = vsub.f32 %v20, %v364
    %v366 = vand.u32 %v365, 4294901760
    %367 = vmatpush1.msra.mxu0 %v366
    %368 = vmatprep.subr.mxu0 0.0
    %v369 = vand.u32 %v21, 4294901760
    %v370 = vsub.f32 %v21, %v369
    %v371 = vand.u32 %v370, 4294901760
    %372 = vmatpush1.msra.mxu0 %v371
    %373 = vmatprep.subr.mxu0 0.0
    %v374 = vand.u32 %v29, 4294901760
    %v375 = vsub.f32 %v29, %v374
    %v376 = vand.u32 %v375, 4294901760
    %377 = vmatpush1.msra.mxu0 %v376
    %378 = vmatprep.subr.mxu0 0.0
    %379 = vmatpush1.msra.mxu0 0.0
    %380 = vmatprep.subr.mxu0 0.0
    %381 = vmatpush1.msra.mxu0 0.0
    %382 = vmatprep.subr.mxu0 0.0
    %383 = vmatpush1.msra.mxu0 0.0
    %384 = vmatprep.subr.mxu0 0.0
    %385 = vmatpush1.msra.mxu0 0.0
    %386 = vmatprep.subr.mxu0 0.0
    %387 = vmatpush1.msra.mxu0 0.0
    %388 = vmatprep.subr.mxu0 0.0
    %389 = vmatpush1.msra.mxu0 0.0
    %390 = vmatprep.subr.mxu0 0.0
    %391 = vmatpush1.msra.mxu0 0.0
    %392 = vmatprep.subr.mxu0 0.0
    %393 = vmatpush1.msra.mxu0 0.0
    %394 = vmatprep.subr.mxu0 0.0
    %395 = vmatpush1.msra.mxu0 0.0
    %396 = vmatprep.subr.mxu0 0.0
    %397 = vmatpush1.msra.mxu0 0.0
    %398 = vmatprep.subr.mxu0 0.0
    %399 = vmatpush1.msra.mxu0 0.0
    %400 = vmatprep.subr.mxu0 0.0
    %401 = vmatpush1.msra.mxu0 0.0
    %402 = vmatprep.subr.mxu0 0.0
    %403 = vmatpush1.msra.mxu0 0.0
    %404 = vmatprep.subr.mxu0 0.0
    %405 = vmatpush1.msra.mxu0 0.0
    %406 = vmatprep.subr.mxu0 0.0
    %407 = vmatpush1.msra.mxu0 0.0
    %408 = vmatprep.subr.mxu0 0.0
    %409 = vmatpush1.msra.mxu0 0.0
    %410 = vmatprep.subr.mxu0 0.0
    %411 = vmatpush1.msra.mxu0 0.0
    %412 = vmatprep.subr.mxu0 0.0
    %413 = vmatpush1.msra.mxu0 0.0
    %414 = vmatprep.subr.mxu0 0.0
    %415 = vmatpush1.msra.mxu0 0.0
    %416 = vmatprep.subr.mxu0 0.0
    %417 = vmatpush1.msra.mxu0 0.0
    %418 = vmatprep.subr.mxu0 0.0
    %419 = vmatpush1.msra.mxu0 0.0
    %420 = vmatprep.subr.mxu0 0.0
    %421 = vmatpush1.msra.mxu0 0.0
    %422 = vmatprep.subr.mxu0 0.0
    %423 = vmatpush1.msra.mxu0 0.0
    %424 = vmatprep.subr.mxu0 0.0
    %425 = vmatpush1.msra.mxu0 0.0
    %426 = vmatprep.subr.mxu0 0.0
    %427 = vmatpush1.msra.mxu0 0.0
    %428 = vmatprep.subr.mxu0 0.0
    %429 = vmatpush1.msra.mxu0 0.0
    %430 = vmatprep.subr.mxu0 0.0
    %431 = vmatpush1.msra.mxu0 0.0
    %432 = vmatprep.subr.mxu0 0.0
    %433 = vmatpush1.msra.mxu0 0.0
    %434 = vmatprep.mubr.f32.mxu0 0.0
    %v435 = vand.u32 %v25, 4294901760
    %436 = vmatmul.mubr.f32.gmra.mrb[0].mxu0 %v435
    %v437 = vpop.f32.mrb[0].mxu0
    %v438 = vadd.f32 %v355, %v437
    %v439 = vpop.f32.mrb[0].mxu0
    %440 = vdwg.mxu0
    %441 = vmatprep.subr.mxu0 0.0
    %v442 = vand.u32 %v19, 4294901760
    %443 = vmatpush1.msra.mxu0 %v442
    %444 = vmatprep.subr.mxu0 0.0
    %v445 = vand.u32 %v20, 4294901760
    %446 = vmatpush1.msra.mxu0 %v445
    %447 = vmatprep.subr.mxu0 0.0
    %v448 = vand.u32 %v21, 4294901760
    %449 = vmatpush1.msra.mxu0 %v448
    %450 = vmatprep.subr.mxu0 0.0
    %v451 = vand.u32 %v29, 4294901760
    %452 = vmatpush1.msra.mxu0 %v451
    %453 = vmatprep.subr.mxu0 0.0
    %454 = vmatpush1.msra.mxu0 0.0
    %455 = vmatprep.subr.mxu0 0.0
    %456 = vmatpush1.msra.mxu0 0.0
    %457 = vmatprep.subr.mxu0 0.0
    %458 = vmatpush1.msra.mxu0 0.0
    %459 = vmatprep.subr.mxu0 0.0
    %460 = vmatpush1.msra.mxu0 0.0
    %461 = vmatprep.subr.mxu0 0.0
    %462 = vmatpush1.msra.mxu0 0.0
    %463 = vmatprep.subr.mxu0 0.0
    %464 = vmatpush1.msra.mxu0 0.0
    %465 = vmatprep.subr.mxu0 0.0
    %466 = vmatpush1.msra.mxu0 0.0
    %467 = vmatprep.subr.mxu0 0.0
    %468 = vmatpush1.msra.mxu0 0.0
    %469 = vmatprep.subr.mxu0 0.0
    %470 = vmatpush1.msra.mxu0 0.0
    %471 = vmatprep.subr.mxu0 0.0
    %472 = vmatpush1.msra.mxu0 0.0
    %473 = vmatprep.subr.mxu0 0.0
    %474 = vmatpush1.msra.mxu0 0.0
    %475 = vmatprep.subr.mxu0 0.0
    %476 = vmatpush1.msra.mxu0 0.0
    %477 = vmatprep.subr.mxu0 0.0
    %478 = vmatpush1.msra.mxu0 0.0
    %479 = vmatprep.subr.mxu0 0.0
    %480 = vmatpush1.msra.mxu0 0.0
    %481 = vmatprep.subr.mxu0 0.0
    %482 = vmatpush1.msra.mxu0 0.0
    %483 = vmatprep.subr.mxu0 0.0
    %484 = vmatpush1.msra.mxu0 0.0
    %485 = vmatprep.subr.mxu0 0.0
    %486 = vmatpush1.msra.mxu0 0.0
    %487 = vmatprep.subr.mxu0 0.0
    %488 = vmatpush1.msra.mxu0 0.0
    %489 = vmatprep.subr.mxu0 0.0
    %490 = vmatpush1.msra.mxu0 0.0
    %491 = vmatprep.subr.mxu0 0.0
    %492 = vmatpush1.msra.mxu0 0.0
    %493 = vmatprep.subr.mxu0 0.0
    %494 = vmatpush1.msra.mxu0 0.0
    %495 = vmatprep.subr.mxu0 0.0
    %496 = vmatpush1.msra.mxu0 0.0
    %497 = vmatprep.subr.mxu0 0.0
    %498 = vmatpush1.msra.mxu0 0.0
    %499 = vmatprep.subr.mxu0 0.0
    %500 = vmatpush1.msra.mxu0 0.0
    %501 = vmatprep.subr.mxu0 0.0
    %502 = vmatpush1.msra.mxu0 0.0
    %503 = vmatprep.subr.mxu0 0.0
    %504 = vmatpush1.msra.mxu0 0.0
    %505 = vmatprep.subr.mxu0 0.0
    %506 = vmatpush1.msra.mxu0 0.0
    %507 = vmatprep.subr.mxu0 0.0
    %508 = vmatpush1.msra.mxu0 0.0
    %509 = vmatprep.mubr.f32.mxu0 0.0
    %v510 = vand.u32 %v25, 4294901760
    %511 = vmatmul.mubr.f32.gmra.mrb[0].mxu0 %v510
    %v512 = vpop.f32.mrb[0].mxu0
    %v513 = vadd.f32 %v438, %v512
    %v514 = vpop.f32.mrb[0].mxu0
    %515 = vdwg.mxu0
    %vm516 = vcmask 130048
    %517 = vst.msk [vmem:[#allocation2] sm:$0xff] %vm516, %v513
    %v518 = vld [vmem:[%s2] sm:$0xff]
    %v519 = vld [vmem:[%s2 + $0x8] sm:$0xff]
    %v520 = vld [vmem:[%s2 + $0x10] sm:$0xff]
    %v521 = vld [vmem:[%s2 + $0x18] sm:$0xf]
    %v523 = vsel %vm27, %v521, 0
    %525 = vmatprep.subr.mxu0 0.0
    %v526 = vand.u32 %v518, 4294901760
    %527 = vmatpush1.msra.mxu0 %v526
    %528 = vmatprep.subr.mxu0 0.0
    %v529 = vand.u32 %v519, 4294901760
    %530 = vmatpush1.msra.mxu0 %v529
    %531 = vmatprep.subr.mxu0 0.0
    %v532 = vand.u32 %v520, 4294901760
    %533 = vmatpush1.msra.mxu0 %v532
    %534 = vmatprep.subr.mxu0 0.0
    %v535 = vand.u32 %v523, 4294901760
    %536 = vmatpush1.msra.mxu0 %v535
    %537 = vmatprep.subr.mxu0 0.0
    %538 = vmatpush1.msra.mxu0 0.0
    %539 = vmatprep.subr.mxu0 0.0
    %540 = vmatpush1.msra.mxu0 0.0
    %541 = vmatprep.subr.mxu0 0.0
    %542 = vmatpush1.msra.mxu0 0.0
    %543 = vmatprep.subr.mxu0 0.0
    %544 = vmatpush1.msra.mxu0 0.0
    %545 = vmatprep.subr.mxu0 0.0
    %546 = vmatpush1.msra.mxu0 0.0
    %547 = vmatprep.subr.mxu0 0.0
    %548 = vmatpush1.msra.mxu0 0.0
    %549 = vmatprep.subr.mxu0 0.0
    %550 = vmatpush1.msra.mxu0 0.0
    %551 = vmatprep.subr.mxu0 0.0
    %552 = vmatpush1.msra.mxu0 0.0
    %553 = vmatprep.subr.mxu0 0.0
    %554 = vmatpush1.msra.mxu0 0.0
    %555 = vmatprep.subr.mxu0 0.0
    %556 = vmatpush1.msra.mxu0 0.0
    %557 = vmatprep.subr.mxu0 0.0
    %558 = vmatpush1.msra.mxu0 0.0
    %559 = vmatprep.subr.mxu0 0.0
    %560 = vmatpush1.msra.mxu0 0.0
    %561 = vmatprep.subr.mxu0 0.0
    %562 = vmatpush1.msra.mxu0 0.0
    %563 = vmatprep.subr.mxu0 0.0
    %564 = vmatpush1.msra.mxu0 0.0
    %565 = vmatprep.subr.mxu0 0.0
    %566 = vmatpush1.msra.mxu0 0.0
    %567 = vmatprep.subr.mxu0 0.0
    %568 = vmatpush1.msra.mxu0 0.0
    %569 = vmatprep.subr.mxu0 0.0
    %570 = vmatpush1.msra.mxu0 0.0
    %571 = vmatprep.subr.mxu0 0.0
    %572 = vmatpush1.msra.mxu0 0.0
    %573 = vmatprep.subr.mxu0 0.0
    %574 = vmatpush1.msra.mxu0 0.0
    %575 = vmatprep.subr.mxu0 0.0
    %576 = vmatpush1.msra.mxu0 0.0
    %577 = vmatprep.subr.mxu0 0.0
    %578 = vmatpush1.msra.mxu0 0.0
    %579 = vmatprep.subr.mxu0 0.0
    %580 = vmatpush1.msra.mxu0 0.0
    %581 = vmatprep.subr.mxu0 0.0
    %582 = vmatpush1.msra.mxu0 0.0
    %583 = vmatprep.subr.mxu0 0.0
    %584 = vmatpush1.msra.mxu0 0.0
    %585 = vmatprep.subr.mxu0 0.0
    %586 = vmatpush1.msra.mxu0 0.0
    %587 = vmatprep.subr.mxu0 0.0
    %588 = vmatpush1.msra.mxu0 0.0
    %589 = vmatprep.subr.mxu0 0.0
    %590 = vmatpush1.msra.mxu0 0.0
    %591 = vmatprep.subr.mxu0 0.0
    %592 = vmatpush1.msra.mxu0 0.0
    %593 = vmatprep.mubr.f32.mxu0 0.0
    %v594 = vand.u32 %v25, 4294901760
    %v595 = vsub.f32 %v25, %v594
    %v596 = vand.u32 %v595, 4294901760
    %v597 = vsub.f32 %v595, %v596
    %v598 = vand.u32 %v597, 4294901760
    %599 = vmatmul.mubr.f32.gmra.mrb[0].mxu0 %v598
    %v600 = vpop.f32.mrb[0].mxu0
    %v601 = vadd.f32 0.0, %v600
    %v602 = vpop.f32.mrb[0].mxu0
    %603 = vdwg.mxu0
    %604 = vmatprep.subr.mxu0 0.0
    %v605 = vand.u32 %v518, 4294901760
    %v606 = vsub.f32 %v518, %v605
    %v607 = vand.u32 %v606, 4294901760
    %v608 = vsub.f32 %v606, %v607
    %v609 = vand.u32 %v608, 4294901760
    %610 = vmatpush1.msra.mxu0 %v609
    %611 = vmatprep.subr.mxu0 0.0
    %v612 = vand.u32 %v519, 4294901760
    %v613 = vsub.f32 %v519, %v612
    %v614 = vand.u32 %v613, 4294901760
    %v615 = vsub.f32 %v613, %v614
    %v616 = vand.u32 %v615, 4294901760
    %617 = vmatpush1.msra.mxu0 %v616
    %618 = vmatprep.subr.mxu0 0.0
    %v619 = vand.u32 %v520, 4294901760
    %v620 = vsub.f32 %v520, %v619
    %v621 = vand.u32 %v620, 4294901760
    %v622 = vsub.f32 %v620, %v621
    %v623 = vand.u32 %v622, 4294901760
    %624 = vmatpush1.msra.mxu0 %v623
    %625 = vmatprep.subr.mxu0 0.0
    %v626 = vand.u32 %v523, 4294901760
    %v627 = vsub.f32 %v523, %v626
    %v628 = vand.u32 %v627, 4294901760
    %v629 = vsub.f32 %v627, %v628
    %v630 = vand.u32 %v629, 4294901760
    %631 = vmatpush1.msra.mxu0 %v630
    %632 = vmatprep.subr.mxu0 0.0
    %633 = vmatpush1.msra.mxu0 0.0
    %634 = vmatprep.subr.mxu0 0.0
    %635 = vmatpush1.msra.mxu0 0.0
    %636 = vmatprep.subr.mxu0 0.0
    %637 = vmatpush1.msra.mxu0 0.0
    %638 = vmatprep.subr.mxu0 0.0
    %639 = vmatpush1.msra.mxu0 0.0
    %640 = vmatprep.subr.mxu0 0.0
    %641 = vmatpush1.msra.mxu0 0.0
    %642 = vmatprep.subr.mxu0 0.0
    %643 = vmatpush1.msra.mxu0 0.0
    %644 = vmatprep.subr.mxu0 0.0
    %645 = vmatpush1.msra.mxu0 0.0
    %646 = vmatprep.subr.mxu0 0.0
    %647 = vmatpush1.msra.mxu0 0.0
    %648 = vmatprep.subr.mxu0 0.0
    %649 = vmatpush1.msra.mxu0 0.0
    %650 = vmatprep.subr.mxu0 0.0
    %651 = vmatpush1.msra.mxu0 0.0
    %652 = vmatprep.subr.mxu0 0.0
    %653 = vmatpush1.msra.mxu0 0.0
    %654 = vmatprep.subr.mxu0 0.0
    %655 = vmatpush1.msra.mxu0 0.0
    %656 = vmatprep.subr.mxu0 0.0
    %657 = vmatpush1.msra.mxu0 0.0
    %658 = vmatprep.subr.mxu0 0.0
    %659 = vmatpush1.msra.mxu0 0.0
    %660 = vmatprep.subr.mxu0 0.0
    %661 = vmatpush1.msra.mxu0 0.0
    %662 = vmatprep.subr.mxu0 0.0
    %663 = vmatpush1.msra.mxu0 0.0
    %664 = vmatprep.subr.mxu0 0.0
    %665 = vmatpush1.msra.mxu0 0.0
    %666 = vmatprep.subr.mxu0 0.0
    %667 = vmatpush1.msra.mxu0 0.0
    %668 = vmatprep.subr.mxu0 0.0
    %669 = vmatpush1.msra.mxu0 0.0
    %670 = vmatprep.subr.mxu0 0.0
    %671 = vmatpush1.msra.mxu0 0.0
    %672 = vmatprep.subr.mxu0 0.0
    %673 = vmatpush1.msra.mxu0 0.0
    %674 = vmatprep.subr.mxu0 0.0
    %675 = vmatpush1.msra.mxu0 0.0
    %676 = vmatprep.subr.mxu0 0.0
    %677 = vmatpush1.msra.mxu0 0.0
    %678 = vmatprep.subr.mxu0 0.0
    %679 = vmatpush1.msra.mxu0 0.0
    %680 = vmatprep.subr.mxu0 0.0
    %681 = vmatpush1.msra.mxu0 0.0
    %682 = vmatprep.subr.mxu0 0.0
    %683 = vmatpush1.msra.mxu0 0.0
    %684 = vmatprep.subr.mxu0 0.0
    %685 = vmatpush1.msra.mxu0 0.0
    %686 = vmatprep.subr.mxu0 0.0
    %687 = vmatpush1.msra.mxu0 0.0
    %688 = vmatprep.mubr.f32.mxu0 0.0
    %v689 = vand.u32 %v25, 4294901760
    %690 = vmatmul.mubr.f32.gmra.mrb[0].mxu0 %v689
    %v691 = vpop.f32.mrb[0].mxu0
    %v692 = vadd.f32 %v601, %v691
    %v693 = vpop.f32.mrb[0].mxu0
    %694 = vdwg.mxu0
    %695 = vmatprep.subr.mxu0 0.0
    %v696 = vand.u32 %v518, 4294901760
    %v697 = vsub.f32 %v518, %v696
    %698 = vmatpush1.msra.mxu0 %v697
    %699 = vmatprep.subr.mxu0 0.0
    %v700 = vand.u32 %v519, 4294901760
    %v701 = vsub.f32 %v519, %v700
    %702 = vmatpush1.msra.mxu0 %v701
    %703 = vmatprep.subr.mxu0 0.0
    %v704 = vand.u32 %v520, 4294901760
    %v705 = vsub.f32 %v520, %v704
    %706 = vmatpush1.msra.mxu0 %v705
    %707 = vmatprep.subr.mxu0 0.0
    %v708 = vand.u32 %v523, 4294901760
    %v709 = vsub.f32 %v523, %v708
    %710 = vmatpush1.msra.mxu0 %v709
    %711 = vmatprep.subr.mxu0 0.0
    %712 = vmatpush1.msra.mxu0 0.0
    %713 = vmatprep.subr.mxu0 0.0
    %714 = vmatpush1.msra.mxu0 0.0
    %715 = vmatprep.subr.mxu0 0.0
    %716 = vmatpush1.msra.mxu0 0.0
    %717 = vmatprep.subr.mxu0 0.0
    %718 = vmatpush1.msra.mxu0 0.0
    %719 = vmatprep.subr.mxu0 0.0
    %720 = vmatpush1.msra.mxu0 0.0
    %721 = vmatprep.subr.mxu0 0.0
    %722 = vmatpush1.msra.mxu0 0.0
    %723 = vmatprep.subr.mxu0 0.0
    %724 = vmatpush1.msra.mxu0 0.0
    %725 = vmatprep.subr.mxu0 0.0
    %726 = vmatpush1.msra.mxu0 0.0
    %727 = vmatprep.subr.mxu0 0.0
    %728 = vmatpush1.msra.mxu0 0.0
    %729 = vmatprep.subr.mxu0 0.0
    %730 = vmatpush1.msra.mxu0 0.0
    %731 = vmatprep.subr.mxu0 0.0
    %732 = vmatpush1.msra.mxu0 0.0
    %733 = vmatprep.subr.mxu0 0.0
    %734 = vmatpush1.msra.mxu0 0.0
    %735 = vmatprep.subr.mxu0 0.0
    %736 = vmatpush1.msra.mxu0 0.0
    %737 = vmatprep.subr.mxu0 0.0
    %738 = vmatpush1.msra.mxu0 0.0
    %739 = vmatprep.subr.mxu0 0.0
    %740 = vmatpush1.msra.mxu0 0.0
    %741 = vmatprep.subr.mxu0 0.0
    %742 = vmatpush1.msra.mxu0 0.0
    %743 = vmatprep.subr.mxu0 0.0
    %744 = vmatpush1.msra.mxu0 0.0
    %745 = vmatprep.subr.mxu0 0.0
    %746 = vmatpush1.msra.mxu0 0.0
    %747 = vmatprep.subr.mxu0 0.0
    %748 = vmatpush1.msra.mxu0 0.0
    %749 = vmatprep.subr.mxu0 0.0
    %750 = vmatpush1.msra.mxu0 0.0
    %751 = vmatprep.subr.mxu0 0.0
    %752 = vmatpush1.msra.mxu0 0.0
    %753 = vmatprep.subr.mxu0 0.0
    %754 = vmatpush1.msra.mxu0 0.0
    %755 = vmatprep.subr.mxu0 0.0
    %756 = vmatpush1.msra.mxu0 0.0
    %757 = vmatprep.subr.mxu0 0.0
    %758 = vmatpush1.msra.mxu0 0.0
    %759 = vmatprep.subr.mxu0 0.0
    %760 = vmatpush1.msra.mxu0 0.0
    %761 = vmatprep.subr.mxu0 0.0
    %762 = vmatpush1.msra.mxu0 0.0
    %763 = vmatprep.subr.mxu0 0.0
    %764 = vmatpush1.msra.mxu0 0.0
    %765 = vmatprep.subr.mxu0 0.0
    %766 = vmatpush1.msra.mxu0 0.0
    %767 = vmatprep.mubr.f32.mxu0 0.0
    %v768 = vand.u32 %v25, 4294901760
    %v769 = vsub.f32 %v25, %v768
    %770 = vmatmul.mubr.f32.gmra.mrb[0].mxu0 %v769
    %v771 = vpop.f32.mrb[0].mxu0
    %v772 = vadd.f32 %v692, %v771
    %v773 = vpop.f32.mrb[0].mxu0
    %774 = vdwg.mxu0
    %775 = vmatprep.subr.mxu0 0.0
    %v776 = vand.u32 %v518, 4294901760
    %777 = vmatpush1.msra.mxu0 %v776
    %778 = vmatprep.subr.mxu0 0.0
    %v779 = vand.u32 %v519, 4294901760
    %780 = vmatpush1.msra.mxu0 %v779
    %781 = vmatprep.subr.mxu0 0.0
    %v782 = vand.u32 %v520, 4294901760
    %783 = vmatpush1.msra.mxu0 %v782
    %784 = vmatprep.subr.mxu0 0.0
    %v785 = vand.u32 %v523, 4294901760
    %786 = vmatpush1.msra.mxu0 %v785
    %787 = vmatprep.subr.mxu0 0.0
    %788 = vmatpush1.msra.mxu0 0.0
    %789 = vmatprep.subr.mxu0 0.0
    %790 = vmatpush1.msra.mxu0 0.0
    %791 = vmatprep.subr.mxu0 0.0
    %792 = vmatpush1.msra.mxu0 0.0
    %793 = vmatprep.subr.mxu0 0.0
    %794 = vmatpush1.msra.mxu0 0.0
    %795 = vmatprep.subr.mxu0 0.0
    %796 = vmatpush1.msra.mxu0 0.0
    %797 = vmatprep.subr.mxu0 0.0
    %798 = vmatpush1.msra.mxu0 0.0
    %799 = vmatprep.subr.mxu0 0.0
    %800 = vmatpush1.msra.mxu0 0.0
    %801 = vmatprep.subr.mxu0 0.0
    %802 = vmatpush1.msra.mxu0 0.0
    %803 = vmatprep.subr.mxu0 0.0
    %804 = vmatpush1.msra.mxu0 0.0
    %805 = vmatprep.subr.mxu0 0.0
    %806 = vmatpush1.msra.mxu0 0.0
    %807 = vmatprep.subr.mxu0 0.0
    %808 = vmatpush1.msra.mxu0 0.0
    %809 = vmatprep.subr.mxu0 0.0
    %810 = vmatpush1.msra.mxu0 0.0
    %811 = vmatprep.subr.mxu0 0.0
    %812 = vmatpush1.msra.mxu0 0.0
    %813 = vmatprep.subr.mxu0 0.0
    %814 = vmatpush1.msra.mxu0 0.0
    %815 = vmatprep.subr.mxu0 0.0
    %816 = vmatpush1.msra.mxu0 0.0
    %817 = vmatprep.subr.mxu0 0.0
    %818 = vmatpush1.msra.mxu0 0.0
    %819 = vmatprep.subr.mxu0 0.0
    %820 = vmatpush1.msra.mxu0 0.0
    %821 = vmatprep.subr.mxu0 0.0
    %822 = vmatpush1.msra.mxu0 0.0
    %823 = vmatprep.subr.mxu0 0.0
    %824 = vmatpush1.msra.mxu0 0.0
    %825 = vmatprep.subr.mxu0 0.0
    %826 = vmatpush1.msra.mxu0 0.0
    %827 = vmatprep.subr.mxu0 0.0
    %828 = vmatpush1.msra.mxu0 0.0
    %829 = vmatprep.subr.mxu0 0.0
    %830 = vmatpush1.msra.mxu0 0.0
    %831 = vmatprep.subr.mxu0 0.0
    %832 = vmatpush1.msra.mxu0 0.0
    %833 = vmatprep.subr.mxu0 0.0
    %834 = vmatpush1.msra.mxu0 0.0
    %835 = vmatprep.subr.mxu0 0.0
    %836 = vmatpush1.msra.mxu0 0.0
    %837 = vmatprep.subr.mxu0 0.0
    %838 = vmatpush1.msra.mxu0 0.0
    %839 = vmatprep.subr.mxu0 0.0
    %840 = vmatpush1.msra.mxu0 0.0
    %841 = vmatprep.subr.mxu0 0.0
    %842 = vmatpush1.msra.mxu0 0.0
    %843 = vmatprep.mubr.f32.mxu0 0.0
    %v844 = vand.u32 %v25, 4294901760
    %v845 = vsub.f32 %v25, %v844
    %v846 = vand.u32 %v845, 4294901760
    %847 = vmatmul.mubr.f32.gmra.mrb[0].mxu0 %v846
    %v848 = vpop.f32.mrb[0].mxu0
    %v849 = vadd.f32 %v772, %v848
    %v850 = vpop.f32.mrb[0].mxu0
    %851 = vdwg.mxu0
    %852 = vmatprep.subr.mxu0 0.0
    %v853 = vand.u32 %v518, 4294901760
    %v854 = vsub.f32 %v518, %v853
    %v855 = vand.u32 %v854, 4294901760
    %856 = vmatpush1.msra.mxu0 %v855
    %857 = vmatprep.subr.mxu0 0.0
    %v858 = vand.u32 %v519, 4294901760
    %v859 = vsub.f32 %v519, %v858
    %v860 = vand.u32 %v859, 4294901760
    %861 = vmatpush1.msra.mxu0 %v860
    %862 = vmatprep.subr.mxu0 0.0
    %v863 = vand.u32 %v520, 4294901760
    %v864 = vsub.f32 %v520, %v863
    %v865 = vand.u32 %v864, 4294901760
    %866 = vmatpush1.msra.mxu0 %v865
    %867 = vmatprep.subr.mxu0 0.0
    %v868 = vand.u32 %v523, 4294901760
    %v869 = vsub.f32 %v523, %v868
    %v870 = vand.u32 %v869, 4294901760
    %871 = vmatpush1.msra.mxu0 %v870
    %872 = vmatprep.subr.mxu0 0.0
    %873 = vmatpush1.msra.mxu0 0.0
    %874 = vmatprep.subr.mxu0 0.0
    %875 = vmatpush1.msra.mxu0 0.0
    %876 = vmatprep.subr.mxu0 0.0
    %877 = vmatpush1.msra.mxu0 0.0
    %878 = vmatprep.subr.mxu0 0.0
    %879 = vmatpush1.msra.mxu0 0.0
    %880 = vmatprep.subr.mxu0 0.0
    %881 = vmatpush1.msra.mxu0 0.0
    %882 = vmatprep.subr.mxu0 0.0
    %883 = vmatpush1.msra.mxu0 0.0
    %884 = vmatprep.subr.mxu0 0.0
    %885 = vmatpush1.msra.mxu0 0.0
    %886 = vmatprep.subr.mxu0 0.0
    %887 = vmatpush1.msra.mxu0 0.0
    %888 = vmatprep.subr.mxu0 0.0
    %889 = vmatpush1.msra.mxu0 0.0
    %890 = vmatprep.subr.mxu0 0.0
    %891 = vmatpush1.msra.mxu0 0.0
    %892 = vmatprep.subr.mxu0 0.0
    %893 = vmatpush1.msra.mxu0 0.0
    %894 = vmatprep.subr.mxu0 0.0
    %895 = vmatpush1.msra.mxu0 0.0
    %896 = vmatprep.subr.mxu0 0.0
    %897 = vmatpush1.msra.mxu0 0.0
    %898 = vmatprep.subr.mxu0 0.0
    %899 = vmatpush1.msra.mxu0 0.0
    %900 = vmatprep.subr.mxu0 0.0
    %901 = vmatpush1.msra.mxu0 0.0
    %902 = vmatprep.subr.mxu0 0.0
    %903 = vmatpush1.msra.mxu0 0.0
    %904 = vmatprep.subr.mxu0 0.0
    %905 = vmatpush1.msra.mxu0 0.0
    %906 = vmatprep.subr.mxu0 0.0
    %907 = vmatpush1.msra.mxu0 0.0
    %908 = vmatprep.subr.mxu0 0.0
    %909 = vmatpush1.msra.mxu0 0.0
    %910 = vmatprep.subr.mxu0 0.0
    %911 = vmatpush1.msra.mxu0 0.0
    %912 = vmatprep.subr.mxu0 0.0
    %913 = vmatpush1.msra.mxu0 0.0
    %914 = vmatprep.subr.mxu0 0.0
    %915 = vmatpush1.msra.mxu0 0.0
    %916 = vmatprep.subr.mxu0 0.0
    %917 = vmatpush1.msra.mxu0 0.0
    %918 = vmatprep.subr.mxu0 0.0
    %919 = vmatpush1.msra.mxu0 0.0
    %920 = vmatprep.subr.mxu0 0.0
    %921 = vmatpush1.msra.mxu0 0.0
    %922 = vmatprep.subr.mxu0 0.0
    %923 = vmatpush1.msra.mxu0 0.0
    %924 = vmatprep.subr.mxu0 0.0
    %925 = vmatpush1.msra.mxu0 0.0
    %926 = vmatprep.subr.mxu0 0.0
    %927 = vmatpush1.msra.mxu0 0.0
    %928 = vmatprep.mubr.f32.mxu0 0.0
    %v929 = vand.u32 %v25, 4294901760
    %930 = vmatmul.mubr.f32.gmra.mrb[0].mxu0 %v929
    %v931 = vpop.f32.mrb[0].mxu0
    %v932 = vadd.f32 %v849, %v931
    %v933 = vpop.f32.mrb[0].mxu0
    %934 = vdwg.mxu0
    %935 = vmatprep.subr.mxu0 0.0
    %v936 = vand.u32 %v518, 4294901760
    %937 = vmatpush1.msra.mxu0 %v936
    %938 = vmatprep.subr.mxu0 0.0
    %v939 = vand.u32 %v519, 4294901760
    %940 = vmatpush1.msra.mxu0 %v939
    %941 = vmatprep.subr.mxu0 0.0
    %v942 = vand.u32 %v520, 4294901760
    %943 = vmatpush1.msra.mxu0 %v942
    %944 = vmatprep.subr.mxu0 0.0
    %v945 = vand.u32 %v523, 4294901760
    %946 = vmatpush1.msra.mxu0 %v945
    %947 = vmatprep.subr.mxu0 0.0
    %948 = vmatpush1.msra.mxu0 0.0
    %949 = vmatprep.subr.mxu0 0.0
    %950 = vmatpush1.msra.mxu0 0.0
    %951 = vmatprep.subr.mxu0 0.0
    %952 = vmatpush1.msra.mxu0 0.0
    %953 = vmatprep.subr.mxu0 0.0
    %954 = vmatpush1.msra.mxu0 0.0
    %955 = vmatprep.subr.mxu0 0.0
    %956 = vmatpush1.msra.mxu0 0.0
    %957 = vmatprep.subr.mxu0 0.0
    %958 = vmatpush1.msra.mxu0 0.0
    %959 = vmatprep.subr.mxu0 0.0
    %960 = vmatpush1.msra.mxu0 0.0
    %961 = vmatprep.subr.mxu0 0.0
    %962 = vmatpush1.msra.mxu0 0.0
    %963 = vmatprep.subr.mxu0 0.0
    %964 = vmatpush1.msra.mxu0 0.0
    %965 = vmatprep.subr.mxu0 0.0
    %966 = vmatpush1.msra.mxu0 0.0
    %967 = vmatprep.subr.mxu0 0.0
    %968 = vmatpush1.msra.mxu0 0.0
    %969 = vmatprep.subr.mxu0 0.0
    %970 = vmatpush1.msra.mxu0 0.0
    %971 = vmatprep.subr.mxu0 0.0
    %972 = vmatpush1.msra.mxu0 0.0
    %973 = vmatprep.subr.mxu0 0.0
    %974 = vmatpush1.msra.mxu0 0.0
    %975 = vmatprep.subr.mxu0 0.0
    %976 = vmatpush1.msra.mxu0 0.0
    %977 = vmatprep.subr.mxu0 0.0
    %978 = vmatpush1.msra.mxu0 0.0
    %979 = vmatprep.subr.mxu0 0.0
    %980 = vmatpush1.msra.mxu0 0.0
    %981 = vmatprep.subr.mxu0 0.0
    %982 = vmatpush1.msra.mxu0 0.0
    %983 = vmatprep.subr.mxu0 0.0
    %984 = vmatpush1.msra.mxu0 0.0
    %985 = vmatprep.subr.mxu0 0.0
    %986 = vmatpush1.msra.mxu0 0.0
    %987 = vmatprep.subr.mxu0 0.0
    %988 = vmatpush1.msra.mxu0 0.0
    %989 = vmatprep.subr.mxu0 0.0
    %990 = vmatpush1.msra.mxu0 0.0
    %991 = vmatprep.subr.mxu0 0.0
    %992 = vmatpush1.msra.mxu0 0.0
    %993 = vmatprep.subr.mxu0 0.0
    %994 = vmatpush1.msra.mxu0 0.0
    %995 = vmatprep.subr.mxu0 0.0
    %996 = vmatpush1.msra.mxu0 0.0
    %997 = vmatprep.subr.mxu0 0.0
    %998 = vmatpush1.msra.mxu0 0.0
    %999 = vmatprep.subr.mxu0 0.0
    %1000 = vmatpush1.msra.mxu0 0.0
    %1001 = vmatprep.subr.mxu0 0.0
    %1002 = vmatpush1.msra.mxu0 0.0
    %1003 = vmatprep.mubr.f32.mxu0 0.0
    %v1004 = vand.u32 %v25, 4294901760
    %1005 = vmatmul.mubr.f32.gmra.mrb[0].mxu0 %v1004
    %v1006 = vpop.f32.mrb[0].mxu0
    %v1007 = vadd.f32 %v932, %v1006
    %v1008 = vpop.f32.mrb[0].mxu0
    %1009 = vdwg.mxu0
    %vm1010 = vcmask 64512
    %1011 = vst.msk [vmem:[#allocation4] sm:$0xff] %vm1010, %v1007
    // Predicated region
    $region14: #{tpu_custom_call.1} parent=1 // pred_check
      _
    $region15: #{tpu_custom_call.1} parent=1 // pred_check_branch
      %1013 = sbr.rel (0) target = $region17
    $region16: #{tpu_custom_call.1} parent=1 // pred_region
      %s1015 = ssub.s32 128, 128
      %1016 = vsyncadd [#allocation3], %s1015
      %s1018 = sshll.u32 [#allocation2], 4
      %s1019 = int_to_ptr.vmem [resolvable:$true] %s1018
      %1021 = dma.vmem_to_hbm [thread:$0]  %s1019, 128, %s3, [#allocation3]
    $region17: #{tpu_custom_call.1} parent=1 // pred_fallthru
      _
    // Predicated region
    $region18: #{tpu_custom_call.1} parent=1 // pred_check
      _
    $region19: #{tpu_custom_call.1} parent=1 // pred_check_branch
      %1023 = sbr.rel (0) target = $region21
    $region20: #{tpu_custom_call.1} parent=1 // pred_region
      %s1025 = ssub.s32 128, 128
      %1026 = vsyncadd [#allocation5], %s1025
      %s1028 = sshll.u32 [#allocation4], 4
      %s1029 = int_to_ptr.vmem [resolvable:$true] %s1028
      %1031 = dma.vmem_to_hbm [thread:$0]  %s1029, 128, %s4, [#allocation5]
    $region21: #{tpu_custom_call.1} parent=1 // pred_fallthru
      _
    // Predicated region
    $region22: #{tpu_custom_call.1} parent=1 // pred_check
      _
    $region23: #{tpu_custom_call.1} parent=1 // pred_check_branch
      %1033 = sbr.rel (0) target = $region25
    $region24: #{tpu_custom_call.1} parent=1 // pred_region
      %1034 = dma.done [#allocation3], 128
    $region25: #{tpu_custom_call.1} parent=1 // pred_fallthru
      _
    // Predicated region
    $region26: #{tpu_custom_call.1} parent=1 // pred_check
      _
    $region27: #{tpu_custom_call.1} parent=1 // pred_check_branch
      %1036 = sbr.rel (0) target = $region29
    $region28: #{tpu_custom_call.1} parent=1 // pred_region
      %1037 = dma.done [#allocation5], 128
    $region29: #{tpu_custom_call.1} parent=1 // pred_fallthru
      _
    %1038 = vsyncpa [#allocation3], 1
    %1039 = vsyncpa [#allocation5], 1

</llo_original>
